<compile_context>
chip_gen: v6e
topology: v6e:2x2x1
jax: 0.10.0
libtpu: 0.0.40
codegen_flags: <defaults>
</compile_context>

<pallas_src>
import math

import jax
import jax.numpy as jnp
from jax.experimental import pallas as pl
from jax.experimental.pallas import tpu as pltpu

_MiB = 1 << 20


def _vnlinear_kernel(x_ref, w_ref, o_ref):
    # x_ref : (TM, k_p)   VMEM tile, streamed over the row axis
    # w_ref : (k_p, n_p)  VMEM-resident (block index constant across the grid)
    # o_ref : (TM, n_p)   VMEM tile (lane-dense when pack > 1)
    o_ref[...] = jnp.dot(
        x_ref[...], w_ref[...], preferred_element_type=jnp.float32
    ).astype(o_ref.dtype)


def _chip_kind() -> str:
    try:
        return jax.devices()[0].device_kind.lower()
    except Exception:  # pragma: no cover - no device visible at trace time
        return ""


def _pick_pack(m: int, dim_in: int, dim_out: int, cap: int) -> int:
    """Largest power-of-two row-packing factor that (a) divides m exactly, so
    packing is a free reshape with no pad/copy, and (b) strictly improves lane
    density (output density first, then input density)."""
    best = 1
    for p in (2, 4, 8):
        if p > cap or m % p != 0:
            continue
        gain = ((p * dim_out) % 128 == 0, (p * dim_in) % 128 == 0)
        have = ((best * dim_out) % 128 == 0, (best * dim_in) % 128 == 0)
        if gain > have:
            best = p
    return best


def vn_linear(
    vector: jax.Array,
    weight: jax.Array,
    *,
    block_rows: int = 32768,          # UNPACKED rows of `vector` per grid step
    min_rows_for_pallas: int = 1024,  # below this, XLA fusion beats a launch
) -> jax.Array:
    """Pallas equivalent of VNLinear.forward.

    vector: (..., dim_in)
    weight: (dim_out, dim_in)   -- same convention as nn.Linear.weight
    returns: (..., dim_out)
    """
    dim_out, dim_in = weight.shape
    assert vector.shape[-1] == dim_in

    lead_shape = vector.shape[:-1]
    m = math.prod(lead_shape) if lead_shape else 1
    out_dtype = vector.dtype

    # Tiny problems: let XLA fuse a plain einsum (launch overhead dominates).
    if m < max(min_rows_for_pallas, 1):
        return jnp.einsum("...i,oi->...o", vector, weight).astype(out_dtype)

    kind = _chip_kind()
    is_v7 = ("v7" in kind) or ("tpu7" in kind)
    # MXU headroom over HBM is large on v6e/v7x, so pack-inflated f32 flops
    # stay fully hidden up to pack=4; on v5e (and older/unknown) cap at 2.
    pack_cap = 4 if (is_v7 or "v6" in kind) else 2

    pack = _pick_pack(m, dim_in, dim_out, pack_cap)
    rows_p = m // pack                 # packed rows (no alignment requirement)
    k_p = pack * dim_in                # packed contraction width
    n_p = pack * dim_out               # packed (lane-dense) output width

    x_p = vector.reshape(rows_p, k_p)  # contiguous reshape: free, no HBM copy
    w_t = weight.T.astype(out_dtype)   # one-time tiny host transpose
    if pack == 1:
        w_p = w_t                      # (dim_in, dim_out)
    else:
        # Block-diagonal weight: packed_out = packed_in @ kron(I_pack, W.T)
        # reproduces `pack` independent row-matmuls exactly (fp32 exact).
        w_p = jnp.kron(jnp.eye(pack, dtype=out_dtype), w_t)   # (k_p, n_p)

    # ---- tiling ----------------------------------------------------------
    itemsize = jnp.dtype(out_dtype).itemsize
    w_bytes = k_p * n_p * itemsize

    def pipeline_bytes(t: int) -> int:  # double-buffered tiles + weight bufs
        return 2 * t * (k_p + n_p) * itemsize + 2 * w_bytes

    tm = min(max(block_rows // pack, 8), rows_p)
    if tm < rows_p:
        tm = max(8, (tm // 8) * 8)      # blocked (non-full) dim must be 8-aligned

    # Generation-aware VMEM budget (v7x: 64 MiB physical VMEM per TC).
    vmem_budget = (40 if is_v7 else 80) * _MiB
    while tm > 8 and pipeline_bytes(tm) > vmem_budget:
        tm = max(8, (tm // 2 // 8) * 8)

    # v7x has 2 TensorCores: ensure the "parallel" axis has >= 2 steps.
    if is_v7 and rows_p >= 16 and pl.cdiv(rows_p, tm) < 2:
        tm = ((pl.cdiv(rows_p, 2) + 7) // 8) * 8

    grid = (pl.cdiv(rows_p, tm),)       # ragged last tile handled by Pallas
    vmem_limit = max(pipeline_bytes(tm) + 8 * _MiB, 32 * _MiB)

    cost = pl.CostEstimate(             # useful (un-inflated) work
        flops=2 * m * dim_in * dim_out,
        transcendentals=0,
        bytes_accessed=itemsize * (m * dim_in + m * dim_out + dim_in * dim_out),
    )

    out_p = pl.pallas_call(
        _vnlinear_kernel,
        out_shape=jax.ShapeDtypeStruct((rows_p, n_p), out_dtype),
        grid_spec=pl.GridSpec(
            grid=grid,
            in_specs=[
                pl.BlockSpec((tm, k_p), lambda i: (i, 0)),   # streamed over M
                pl.BlockSpec((k_p, n_p), lambda i: (0, 0)),  # VMEM-resident W
            ],
            out_specs=pl.BlockSpec((tm, n_p), lambda i: (i, 0)),
        ),
        compiler_params=pltpu.CompilerParams(
            dimension_semantics=("parallel",),   # independent tiles; v7x 2-TC
            vmem_limit_bytes=int(vmem_limit),
        ),
        cost_estimate=cost,
    )(x_p, w_p)

    # Packed output unpacks with a free reshape (row order is preserved).
    return out_p.reshape(*lead_shape, dim_out)


if __name__ == "__main__":
    key = jax.random.PRNGKey(0)
    k_w, k_x1, k_x2, k_x3 = jax.random.split(key, 4)

    dim_in, dim_out = 32, 64

    # Deterministic weight matching nn.Linear's uniform(-1/sqrt(in), 1/sqrt(in)).
    bound = 1.0 / (dim_in ** 0.5)
    weight = jax.random.uniform(
        k_w, (dim_out, dim_in), minval=-bound, maxval=bound, dtype=jnp.float32
    )

    # 1) Small VN-style input (batch=2, points=8, 3 spatial dims, dim_in=32):
    #    packed, lane-dense path (pack divides M).
    v1 = jax.random.normal(k_x1, (2, 8, 3, dim_in), dtype=jnp.float32)
    o1 = jax.block_until_ready(vn_linear(v1, weight, min_rows_for_pallas=0))
    r1 = jnp.einsum("...i,oi->...o", v1, weight)
    assert o1.shape == (2, 8, 3, dim_out)
    assert jnp.allclose(o1, r1, atol=1e-5, rtol=1e-5)

    # 2) Odd row count (M = 6951): pack=1, ragged last M tile, zero host-side
    #    pad / slice copies.
    v2 = jax.random.normal(k_x2, (7, 331, 3, dim_in), dtype=jnp.float32)
    o2 = jax.block_until_ready(vn_linear(v2, weight, min_rows_for_pallas=0))
    r2 = jnp.einsum("...i,oi->...o", v2, weight)
    assert o2.shape == (7, 331, 3, dim_out)
    assert jnp.allclose(o2, r2, atol=1e-4, rtol=1e-4)

    # 3) Multi-step grid with a ragged last tile on the packed path.
    v3 = jax.random.normal(k_x3, (4, 500, 3, dim_in), dtype=jnp.float32)
    o3 = jax.block_until_ready(
        vn_linear(v3, weight, block_rows=2048, min_rows_for_pallas=0)
    )
    r3 = jnp.einsum("...i,oi->...o", v3, weight)
    assert o3.shape == (4, 500, 3, dim_out)
    assert jnp.allclose(o3, r3, atol=1e-4, rtol=1e-4)

    print("KERNEL_OK")
</pallas_src>

<mosaic_0001>
module attributes {stable_mosaic.version = 11 : i64} {
  func.func @_vnlinear_kernel(%arg0: i32, %arg1: memref<24x64xf32, #tpu.memory_space<vmem>>, %arg2: memref<64x128xf32, #tpu.memory_space<vmem>>, %arg3: memref<24x128xf32, #tpu.memory_space<vmem>>) attributes {dimension_semantics = [#tpu.dimension_semantics<parallel>], iteration_bounds = array<i64: 1>, scalar_prefetch = 0 : i64, scratch_operands = 0 : i64, tpu.core_type = #tpu.core_type<tc>, window_params = [{transform_indices = @transform_0, window_bounds = array<i64: 24, 64>}, {pipeline_mode = #tpu.pipeline_mode<synchronous>, transform_indices = @transform_1, window_bounds = array<i64: 64, 128>}, {transform_indices = @transform_2, window_bounds = array<i64: 24, 128>}]} {
    %c0 = arith.constant 0 : index
    %c0_0 = arith.constant 0 : index
    %0 = vector.load %arg1[%c0, %c0_0] : memref<24x64xf32, #tpu.memory_space<vmem>>, vector<24x64xf32>
    %c0_1 = arith.constant 0 : index
    %c0_2 = arith.constant 0 : index
    %1 = vector.load %arg2[%c0_1, %c0_2] : memref<64x128xf32, #tpu.memory_space<vmem>>, vector<64x128xf32>
    %cst = arith.constant dense<0.000000e+00> : vector<24x128xf32>
    %2 = tpu.matmul %0, %1, %cst {dimension_numbers = #tpu.dot_dimension_numbers<[1], [0], [0], [1], [0, 0, 1, 1], [], []>} : vector<24x64xf32>, vector<64x128xf32>, vector<24x128xf32> -> vector<24x128xf32>
    %c0_3 = arith.constant 0 : index
    %c0_4 = arith.constant 0 : index
    %3 = vector.load %arg3[%c0_3, %c0_4] : memref<24x128xf32, #tpu.memory_space<vmem>>, vector<24x128xf32>
    tpu.vector_store %arg3[%c0_3, %c0_4], %2 {strides = array<i32>} : memref<24x128xf32, #tpu.memory_space<vmem>>, vector<24x128xf32>,
    return
  }
  func.func @transform_0(%arg0: i32) -> (i32, i32) {
    %c0_i32 = arith.constant 0 : i32
    %c0_i32_0 = arith.constant 0 : i32
    return %arg0, %c0_i32 : i32, i32
  }
  func.func @transform_1(%arg0: i32) -> (i32, i32) {
    %c0_i32 = arith.constant 0 : i32
    %c0_i32_0 = arith.constant 0 : i32
    %c0_i32_1 = arith.constant 0 : i32
    return %c0_i32, %c0_i32_0 : i32, i32
  }
  func.func @transform_2(%arg0: i32) -> (i32, i32) {
    %c0_i32 = arith.constant 0 : i32
    %c0_i32_0 = arith.constant 0 : i32
    return %arg0, %c0_i32 : i32, i32
  }
}

</mosaic_0001>

<llo_original>
// kernel: tpu_custom_call.1
$region0: #{tpu_custom_call.1}
  #allocation0 [shape = 'u32[]', space=smem, size = 0x4, offset = 0x4, fixed_abs, tag = 'smem constant byte address 0x4 - core index']
  #allocation1 [shape = 'u32[144,128]{1,0:T(1,128)}', space=vmem, size = 0x12000, scoped, tag = 'internal scratch']
  %s0 = inlined_call_operand.hbm [shape: f32[24,64], index: 0, kind: input, shape index: {}]
  %s1 = inlined_call_operand.hbm [shape: f32[64,128], index: 1, kind: input, shape index: {}]
  %s2 = inlined_call_operand.hbm [shape: f32[24,128], index: 2, kind: output, shape index: {}]
  %s3 = sld [smem:[#allocation0]]
  $region26: #{tpu_custom_call.1} parent=0
    _
  %s5 = ssub.s32 1, %s3
  %s6 = scalar_select 0, %s5, %s3
  $region1: #{tpu_custom_call.1} parent=0
    #allocation2 [shape = 'u8[12288]{0}', space=vmem, size = 0x3000, scoped, tag = 'input window, operand 0, single buffered']
    #allocation3 [shape = 's32[1]{0}', space=sflag, size = 0x4, scoped, tag = 'scoped memory for tpu_custom_call.1']
    #allocation4 [shape = 's32[1]{0}', space=sflag, size = 0x4, scoped, tag = 'scoped memory for tpu_custom_call.1']
    #allocation5 [shape = 'u8[32768]{0}', space=vmem, size = 0x8000, scoped, tag = 'input window, operand 1, single buffered']
    #allocation6 [shape = 's32[1]{0}', space=sflag, size = 0x4, scoped, tag = 'scoped memory for tpu_custom_call.1']
    #allocation7 [shape = 'u8[12288]{0}', space=vmem, size = 0x3000, scoped, tag = 'output window, operand 0, single buffered']
    %7 = vsyncpa [#allocation3], 0
    %8 = vsyncpa [#allocation6], 0
    %9 = vsyncpa [#allocation4], 0
    // Predicated region
    $region2: #{tpu_custom_call.1} parent=1 // pred_check
      _
    $region3: #{tpu_custom_call.1} parent=1 // pred_check_branch
      %11 = sbr.rel (0) target = $region5
    $region4: #{tpu_custom_call.1} parent=1 // pred_region
      %s13 = ssub.s32 384, 384
      %14 = vsyncadd [#allocation3], %s13
      %s15 = sshll.u32 [#allocation2], 4
      %s16 = int_to_ptr.vmem [resolvable:$true] %s15
      %21 = dma.hbm_to_vmem [thread:$0]  %s0, 384, %s16, [#allocation3], 128, 128, 8
    $region5: #{tpu_custom_call.1} parent=1 // pred_fallthru
      _
    // Predicated region
    $region6: #{tpu_custom_call.1} parent=1 // pred_check
      _
    $region7: #{tpu_custom_call.1} parent=1 // pred_check_branch
      %23 = sbr.rel (0) target = $region9
    $region8: #{tpu_custom_call.1} parent=1 // pred_region
      %s25 = ssub.s32 1024, 1024
      %26 = vsyncadd [#allocation6], %s25
      %s27 = sshll.u32 [#allocation5], 4
      %s28 = int_to_ptr.vmem [resolvable:$true] %s27
      %33 = dma.hbm_to_vmem [thread:$0]  %s1, 1024, %s28, [#allocation6], 128, 128, 8
    $region9: #{tpu_custom_call.1} parent=1 // pred_fallthru
      _
    // Predicated region
    $region10: #{tpu_custom_call.1} parent=1 // pred_check
      _
    $region11: #{tpu_custom_call.1} parent=1 // pred_check_branch
      %35 = sbr.rel (0) target = $region13
    $region12: #{tpu_custom_call.1} parent=1 // pred_region
      %36 = dma.done [#allocation3], 384
    $region13: #{tpu_custom_call.1} parent=1 // pred_fallthru
      _
    // Predicated region
    $region14: #{tpu_custom_call.1} parent=1 // pred_check
      _
    $region15: #{tpu_custom_call.1} parent=1 // pred_check_branch
      %38 = sbr.rel (0) target = $region17
    $region16: #{tpu_custom_call.1} parent=1 // pred_region
      %39 = dma.done [#allocation6], 1024
    $region17: #{tpu_custom_call.1} parent=1 // pred_fallthru
      _
    %v40 = vld [vmem:[#allocation2] sm:$0xff]
    %v41 = vld [vmem:[#allocation2 + $0x8] sm:$0xff]
    %v42 = vld [vmem:[#allocation2 + $0x10] sm:$0xff]
    %v43 = vld [vmem:[#allocation5] sm:$0xff]
    %v44 = vld [vmem:[#allocation5 + $0x8] sm:$0xff]
    %v45 = vld [vmem:[#allocation5 + $0x10] sm:$0xff]
    %v46 = vld [vmem:[#allocation5 + $0x18] sm:$0xff]
    %v47 = vld [vmem:[#allocation5 + $0x20] sm:$0xff]
    %v48 = vld [vmem:[#allocation5 + $0x28] sm:$0xff]
    %v49 = vld [vmem:[#allocation5 + $0x30] sm:$0xff]
    %v50 = vld [vmem:[#allocation5 + $0x38] sm:$0xff]
    %vm51 = vcmask 523264
    %v53 = vsel %vm51, %v40, 0
    %v56 = vsel %vm51, %v41, 0
    %v59 = vsel %vm51, %v42, 0
    %61 = vmatprep.subr.mxu0 0.0
    %62 = vmatpush1.msra.mxu0 0.0
    %63 = vmatprep.subr.mxu0 0.0
    %64 = vmatpush1.msra.mxu0 0.0
    %65 = vmatprep.subr.mxu0 0.0
    %66 = vmatpush1.msra.mxu0 0.0
    %67 = vmatprep.subr.mxu0 0.0
    %68 = vmatpush1.msra.mxu0 0.0
    %69 = vmatprep.subr.mxu0 0.0
    %70 = vmatpush1.msra.mxu0 0.0
    %71 = vmatprep.subr.mxu0 0.0
    %72 = vmatpush1.msra.mxu0 0.0
    %73 = vmatprep.subr.mxu0 0.0
    %74 = vmatpush1.msra.mxu0 0.0
    %75 = vmatprep.subr.mxu0 0.0
    %76 = vmatpush1.msra.mxu0 0.0
    %77 = vmatprep.subr.mxu0 0.0
    %78 = vmatpush1.msra.mxu0 %v50
    %79 = vmatprep.subr.mxu0 0.0
    %80 = vmatpush1.msra.mxu0 %v49
    %81 = vmatprep.subr.mxu0 0.0
    %82 = vmatpush1.msra.mxu0 %v48
    %83 = vmatprep.subr.mxu0 0.0
    %84 = vmatpush1.msra.mxu0 %v47
    %85 = vmatprep.subr.mxu0 0.0
    %86 = vmatpush1.msra.mxu0 %v46
    %87 = vmatprep.subr.mxu0 0.0
    %88 = vmatpush1.msra.mxu0 %v45
    %89 = vmatprep.subr.mxu0 0.0
    %90 = vmatpush1.msra.mxu0 %v44
    %91 = vmatprep.subr.mxu0 0.0
    %92 = vmatpush1.msra.mxu0 %v43
    %93 = vmatprep.subr.mxu0 0.0
    %94 = vmatpush2.msra.mxu0 0.0
    %95 = vmatprep.subr.mxu0 0.0
    %96 = vmatpush2.msra.mxu0 0.0
    %97 = vmatprep.subr.mxu0 0.0
    %98 = vmatpush2.msra.mxu0 0.0
    %99 = vmatprep.subr.mxu0 0.0
    %100 = vmatpush2.msra.mxu0 0.0
    %101 = vmatprep.subr.mxu0 0.0
    %102 = vmatpush2.msra.mxu0 0.0
    %103 = vmatprep.subr.mxu0 0.0
    %104 = vmatpush2.msra.mxu0 0.0
    %105 = vmatprep.subr.mxu0 0.0
    %106 = vmatpush2.msra.mxu0 0.0
    %107 = vmatprep.subr.mxu0 0.0
    %108 = vmatpush2.msra.mxu0 0.0
    %109 = vmatprep.subr.mxu0 0.0
    %110 = vmatpush2.msra.mxu0 0.0
    %111 = vmatprep.subr.mxu0 0.0
    %112 = vmatpush2.msra.mxu0 0.0
    %113 = vmatprep.subr.mxu0 0.0
    %114 = vmatpush2.msra.mxu0 0.0
    %115 = vmatprep.subr.mxu0 0.0
    %116 = vmatpush2.msra.mxu0 0.0
    %117 = vmatprep.subr.mxu0 0.0
    %118 = vmatpush2.msra.mxu0 0.0
    %119 = vmatprep.subr.mxu0 0.0
    %120 = vmatpush2.msra.mxu0 0.0
    %121 = vmatprep.subr.mxu0 0.0
    %122 = vmatpush2.msra.mxu0 0.0
    %123 = vmatprep.subr.mxu0 0.0
    %124 = vmatpush2.msra.mxu0 0.0
    %125 = vmatprep.mubr.f32.mxu0 0.0
    %126 = vmatmul.mubr.f32.gmra.mxu0 %v53
    %v127 = vpop.f32.mrf.mxu0
    %v128 = vadd.f32 0.0, %v127
    %v129 = vpop.f32.mrf.mxu0
    %130 = vmatprep.mubr.f32.mxu0 0.0
    %131 = vmatmul.mubr.f32.gmra.mxu0 %v56
    %v132 = vpop.f32.mrf.mxu0
    %v133 = vadd.f32 0.0, %v132
    %v134 = vpop.f32.mrf.mxu0
    %135 = vmatprep.mubr.f32.mxu0 0.0
    %136 = vmatmul.mubr.f32.gmra.mxu0 %v59
    %v137 = vpop.f32.mrf.mxu0
    %v138 = vadd.f32 0.0, %v137
    %v139 = vpop.f32.mrf.mxu0
    %140 = vdwg.mxu0
    %141 = vst [vmem:[#allocation7] sm:$0xff] %v128
    %142 = vst [vmem:[#allocation7 + $0x8] sm:$0xff] %v133
    %143 = vst [vmem:[#allocation7 + $0x10] sm:$0xff] %v138
    // Predicated region
    $region18: #{tpu_custom_call.1} parent=1 // pred_check
      _
    $region19: #{tpu_custom_call.1} parent=1 // pred_check_branch
      %145 = sbr.rel (0) target = $region21
    $region20: #{tpu_custom_call.1} parent=1 // pred_region
      %s147 = ssub.s32 384, 384
      %148 = vsyncadd [#allocation4], %s147
      %s149 = sshll.u32 [#allocation7], 4
      %s150 = int_to_ptr.vmem [resolvable:$true] %s149
      %155 = dma.vmem_to_hbm [thread:$0]  %s150, 384, %s2, [#allocation4], 128, 128, 8
    $region21: #{tpu_custom_call.1} parent=1 // pred_fallthru
      _
    // Predicated region
    $region22: #{tpu_custom_call.1} parent=1 // pred_check
      _
    $region23: #{tpu_custom_call.1} parent=1 // pred_check_branch
      %157 = sbr.rel (0) target = $region25
    $region24: #{tpu_custom_call.1} parent=1 // pred_region
      %158 = dma.done [#allocation4], 384
    $region25: #{tpu_custom_call.1} parent=1 // pred_fallthru
      _
    %159 = vsyncpa [#allocation3], 1
    %160 = vsyncpa [#allocation6], 1
    %161 = vsyncpa [#allocation4], 1

</llo_original>
